<compile_context>
chip_gen: v7x
topology: tpu7x:2x2x1
jax: 0.10.0
libtpu: 0.0.40
codegen_flags: <defaults>
</compile_context>

<pallas_src>
import functools

import jax
import jax.numpy as jnp
from jax import lax
from jax.experimental import pallas as pl
from jax.experimental.pallas import tpu as pltpu

N_IN, N_HID, N_OUT = 3, 6, 3
LANE = 128


def _mlp_kernel(w1_ref, b1_ref, w2_ref, b2_ref, x_ref, o_ref, *, chunk, n_chunks):
    """x_ref: (3, TILE_ROWS, 128) input block; o_ref: (3, TILE_ROWS, 128) f32.

    Weights/biases are scalars in SMEM; all vector work is on dense
    (chunk, 128) slabs.  fc2 is folded into the fc1 loop so per-chunk live
    state is 3 (inputs) + 1 (hidden) + 3 (output accumulators) values.
    """
    w1 = [[w1_ref[k, j] for j in range(N_HID)] for k in range(N_IN)]
    b1 = [b1_ref[j] for j in range(N_HID)]
    w2 = [[w2_ref[j, i] for i in range(N_OUT)] for j in range(N_HID)]
    b2 = [b2_ref[i] for i in range(N_OUT)]

    def body(c):
        start = c * chunk
        if not isinstance(start, int):          # only traced when chunk % 8 == 0
            start = pl.multiple_of(start, chunk)
        rows = pl.ds(start, chunk)

        xs = [x_ref[k, rows, :].astype(jnp.float32) for k in range(N_IN)]   # 3 x (chunk,128)

        acc = [None] * N_OUT
        for j in range(N_HID):                  # fc1 + ReLU, fc2 interleaved
            h = xs[0] * w1[0][j]
            for k in range(1, N_IN):
                h = h + xs[k] * w1[k][j]
            h = jnp.maximum(h + b1[j], 0.0)
            for i in range(N_OUT):
                t = h * w2[j][i]
                acc[i] = t if acc[i] is None else acc[i] + t

        for i in range(N_OUT):                  # full-width unmasked stores
            o_ref[i, rows, :] = acc[i] + b2[i]

    if n_chunks == 1:
        body(0)
    else:
        def loop_body(c, carry):
            body(c)
            return carry
        lax.fori_loop(0, n_chunks, loop_body, 0)


def _round_up(v, m):
    return ((v + m - 1) // m) * m


def bigger_model_forward(x, w1, b1, w2, b2, *, tile_rows=2048):
    """Forward pass of BiggerModel.

    x : any shape whose total size is divisible by 3 (PyTorch's view(-1, 3)).
    w1: (3, 6), b1: (6,)  -- fc1 stored (in, out), i.e. y = x @ w1 + b1
    w2: (6, 3), b2: (3,)  -- fc2
    Returns (B, 3) float32.
    """
    x2d = jnp.reshape(x, (-1, N_IN))
    if x2d.dtype not in (jnp.float32, jnp.bfloat16):
        x2d = x2d.astype(jnp.float32)
    B = x2d.shape[0]
    b_pad = _round_up(B, LANE)
    n_rows = b_pad // LANE

    # (B, 3) -> (3, rows, 128).  The transpose is one HBM pass over x; the
    # reshape is free (row-major).  TODO(synk): if the surrounding graph can
    # produce/consume the (3, rows, 128) layout directly, this transpose and
    # the inverse one on the output disappear -- they are the dominant
    # remaining end-to-end HBM cost for this purely memory-bound op.
    xT = jnp.transpose(x2d)
    if b_pad != B:
        xT = jnp.pad(xT, ((0, 0), (0, b_pad - B)))   # 128-lane granule only
    x3 = jnp.reshape(xT, (N_IN, n_rows, LANE))

    # Tile sizing.  Partial last grid blocks are handled by Pallas boundary
    # masking (garbage lanes are discarded by the [:, :B] slice below).
    if tile_rows >= n_rows:
        tile_rows = n_rows                               # single full-extent block
    else:
        tile_rows = max(16, (tile_rows // 16) * 16)      # sublane granule (f32/bf16)
    if tile_rows % 64 == 0:
        chunk = 64            # 8 vregs per value -> fully register-resident chunk
    elif tile_rows % 8 == 0:
        chunk = 8
    else:
        chunk = tile_rows     # tiny full-extent tiles: single chunk
    n_chunks = tile_rows // chunk
    n_tiles = pl.cdiv(n_rows, tile_rows)

    # VMEM budget: double-buffered in+out blocks plus slack, kept well under
    # v7x's 64 MiB per-core VMEM.
    block_bytes = (N_IN + N_OUT) * tile_rows * LANE * 4
    vmem_limit = int(min(100 * 2**20, max(32 * 2**20, 4 * block_bytes)))

    kernel = functools.partial(_mlp_kernel, chunk=chunk, n_chunks=n_chunks)
    smem = pl.BlockSpec(memory_space=pltpu.MemorySpace.SMEM)
    # TODO(synk): on v7x, profile whether the 1-D "parallel" grid is actually
    # split across the 2 TensorCores; if not, move to a CORE_PARALLEL leading
    # axis (kept as plain "parallel" here so v5e/v6e compile unchanged).
    out3 = pl.pallas_call(
        kernel,
        out_shape=jax.ShapeDtypeStruct((N_OUT, n_rows, LANE), jnp.float32),
        grid=(n_tiles,),
        in_specs=[
            smem, smem, smem, smem,                                   # w1, b1, w2, b2
            pl.BlockSpec((N_IN, tile_rows, LANE), lambda i: (0, i, 0)),
        ],
        out_specs=pl.BlockSpec((N_OUT, tile_rows, LANE), lambda i: (0, i, 0)),
        compiler_params=pltpu.CompilerParams(
            dimension_semantics=("parallel",),
            vmem_limit_bytes=vmem_limit,
        ),
    )(w1.astype(jnp.float32), b1.astype(jnp.float32),
      w2.astype(jnp.float32), b2.astype(jnp.float32), x3)

    out = jnp.reshape(out3, (N_OUT, b_pad))[:, :B]
    return jnp.transpose(out)                            # back to (B, 3)


def init_params(seed=0):
    """Xavier-uniform weights, zero biases (same init scheme as the module)."""
    # TODO(synk): bit-exact parity with torch.manual_seed's RNG stream is not
    # reproducible in JAX; only the init scheme (xavier_uniform / zeros) matches.
    key = jax.random.PRNGKey(seed)
    k1, k2 = jax.random.split(key)

    def xavier_uniform(k, fan_in, fan_out):
        bound = (6.0 / (fan_in + fan_out)) ** 0.5
        # stored as (in, out) for the x @ W convention used by the kernel
        return jax.random.uniform(k, (fan_in, fan_out), jnp.float32,
                                  minval=-bound, maxval=bound)

    w1 = xavier_uniform(k1, N_IN, N_HID)
    b1 = jnp.zeros((N_HID,), jnp.float32)
    w2 = xavier_uniform(k2, N_HID, N_OUT)
    b2 = jnp.zeros((N_OUT,), jnp.float32)
    return w1, b1, w2, b2


if __name__ == "__main__":
    w1, b1, w2, b2 = init_params(seed=0)

    def ref_fwd(x):
        x2d = jnp.reshape(x, (-1, N_IN)).astype(jnp.float32)
        return jnp.maximum(x2d @ w1 + b1, 0.0) @ w2 + b2

    # small batch (single full-extent block)
    x_small = jax.random.normal(jax.random.PRNGKey(0), (8, 3), dtype=jnp.float32)
    out_small = jax.block_until_ready(bigger_model_forward(x_small, w1, b1, w2, b2))
    assert out_small.shape == (8, 3)
    assert jnp.allclose(out_small, ref_fwd(x_small), atol=1e-5, rtol=1e-5), \
        "mismatch vs reference (small batch)"

    # non-tile-aligned batch: multi-step grid + partial boundary block + chunk loop
    x_big = jax.random.normal(jax.random.PRNGKey(1), (2597, 3), dtype=jnp.float32)
    out_big = jax.block_until_ready(
        bigger_model_forward(x_big, w1, b1, w2, b2, tile_rows=16))
    assert out_big.shape == (2597, 3)
    assert jnp.allclose(out_big, ref_fwd(x_big), atol=1e-5, rtol=1e-5), \
        "mismatch vs reference (tiled batch, partial last block)"

    # same batch through the default (single big tile) path
    out_big2 = jax.block_until_ready(bigger_model_forward(x_big, w1, b1, w2, b2))
    assert jnp.allclose(out_big2, ref_fwd(x_big), atol=1e-5, rtol=1e-5), \
        "mismatch vs reference (default tile path)"

    # bf16 pass-through path (upcast happens inside the kernel)
    x_bf16 = x_small.astype(jnp.bfloat16)
    out_bf16 = jax.block_until_ready(bigger_model_forward(x_bf16, w1, b1, w2, b2))
    assert jnp.allclose(out_bf16, ref_fwd(x_bf16), atol=1e-4, rtol=1e-4), \
        "mismatch vs reference (bf16 input)"

    print("KERNEL_OK")
</pallas_src>

<mosaic_0001>
module attributes {stable_mosaic.version = 11 : i64} {
  func.func @_mlp_kernel(%arg0: i32, %arg1: memref<3x6xf32, #tpu.memory_space<smem>>, %arg2: memref<6xf32, #tpu.memory_space<smem>>, %arg3: memref<6x3xf32, #tpu.memory_space<smem>>, %arg4: memref<3xf32, #tpu.memory_space<smem>>, %arg5: memref<3x1x128xf32, #tpu.memory_space<vmem>>, %arg6: memref<3x1x128xf32, #tpu.memory_space<vmem>>) attributes {dimension_semantics = [#tpu.dimension_semantics<parallel>], iteration_bounds = array<i64: 1>, scalar_prefetch = 0 : i64, scratch_operands = 0 : i64, tpu.core_type = #tpu.core_type<tc>, window_params = [{transform_indices = @transform_0, window_bounds = array<i64: 3, 6>}, {transform_indices = @transform_1, window_bounds = array<i64: 6>}, {transform_indices = @transform_2, window_bounds = array<i64: 6, 3>}, {transform_indices = @transform_3, window_bounds = array<i64: 3>}, {transform_indices = @transform_4, window_bounds = array<i64: 3, 1, 128>}, {transform_indices = @transform_5, window_bounds = array<i64: 3, 1, 128>}]} {
    %c0 = arith.constant 0 : index
    %c0_0 = arith.constant 0 : index
    %0 = memref.load %arg1[%c0, %c0_0] : memref<3x6xf32, #tpu.memory_space<smem>>
    %c0_1 = arith.constant 0 : index
    %c1 = arith.constant 1 : index
    %1 = memref.load %arg1[%c0_1, %c1] : memref<3x6xf32, #tpu.memory_space<smem>>
    %c0_2 = arith.constant 0 : index
    %c2 = arith.constant 2 : index
    %2 = memref.load %arg1[%c0_2, %c2] : memref<3x6xf32, #tpu.memory_space<smem>>
    %c0_3 = arith.constant 0 : index
    %c3 = arith.constant 3 : index
    %3 = memref.load %arg1[%c0_3, %c3] : memref<3x6xf32, #tpu.memory_space<smem>>
    %c0_4 = arith.constant 0 : index
    %c4 = arith.constant 4 : index
    %4 = memref.load %arg1[%c0_4, %c4] : memref<3x6xf32, #tpu.memory_space<smem>>
    %c0_5 = arith.constant 0 : index
    %c5 = arith.constant 5 : index
    %5 = memref.load %arg1[%c0_5, %c5] : memref<3x6xf32, #tpu.memory_space<smem>>
    %c1_6 = arith.constant 1 : index
    %c0_7 = arith.constant 0 : index
    %6 = memref.load %arg1[%c1_6, %c0_7] : memref<3x6xf32, #tpu.memory_space<smem>>
    %c1_8 = arith.constant 1 : index
    %c1_9 = arith.constant 1 : index
    %7 = memref.load %arg1[%c1_8, %c1_9] : memref<3x6xf32, #tpu.memory_space<smem>>
    %c1_10 = arith.constant 1 : index
    %c2_11 = arith.constant 2 : index
    %8 = memref.load %arg1[%c1_10, %c2_11] : memref<3x6xf32, #tpu.memory_space<smem>>
    %c1_12 = arith.constant 1 : index
    %c3_13 = arith.constant 3 : index
    %9 = memref.load %arg1[%c1_12, %c3_13] : memref<3x6xf32, #tpu.memory_space<smem>>
    %c1_14 = arith.constant 1 : index
    %c4_15 = arith.constant 4 : index
    %10 = memref.load %arg1[%c1_14, %c4_15] : memref<3x6xf32, #tpu.memory_space<smem>>
    %c1_16 = arith.constant 1 : index
    %c5_17 = arith.constant 5 : index
    %11 = memref.load %arg1[%c1_16, %c5_17] : memref<3x6xf32, #tpu.memory_space<smem>>
    %c2_18 = arith.constant 2 : index
    %c0_19 = arith.constant 0 : index
    %12 = memref.load %arg1[%c2_18, %c0_19] : memref<3x6xf32, #tpu.memory_space<smem>>
    %c2_20 = arith.constant 2 : index
    %c1_21 = arith.constant 1 : index
    %13 = memref.load %arg1[%c2_20, %c1_21] : memref<3x6xf32, #tpu.memory_space<smem>>
    %c2_22 = arith.constant 2 : index
    %c2_23 = arith.constant 2 : index
    %14 = memref.load %arg1[%c2_22, %c2_23] : memref<3x6xf32, #tpu.memory_space<smem>>
    %c2_24 = arith.constant 2 : index
    %c3_25 = arith.constant 3 : index
    %15 = memref.load %arg1[%c2_24, %c3_25] : memref<3x6xf32, #tpu.memory_space<smem>>
    %c2_26 = arith.constant 2 : index
    %c4_27 = arith.constant 4 : index
    %16 = memref.load %arg1[%c2_26, %c4_27] : memref<3x6xf32, #tpu.memory_space<smem>>
    %c2_28 = arith.constant 2 : index
    %c5_29 = arith.constant 5 : index
    %17 = memref.load %arg1[%c2_28, %c5_29] : memref<3x6xf32, #tpu.memory_space<smem>>
    %c0_30 = arith.constant 0 : index
    %18 = memref.load %arg2[%c0_30] : memref<6xf32, #tpu.memory_space<smem>>
    %c1_31 = arith.constant 1 : index
    %19 = memref.load %arg2[%c1_31] : memref<6xf32, #tpu.memory_space<smem>>
    %c2_32 = arith.constant 2 : index
    %20 = memref.load %arg2[%c2_32] : memref<6xf32, #tpu.memory_space<smem>>
    %c3_33 = arith.constant 3 : index
    %21 = memref.load %arg2[%c3_33] : memref<6xf32, #tpu.memory_space<smem>>
    %c4_34 = arith.constant 4 : index
    %22 = memref.load %arg2[%c4_34] : memref<6xf32, #tpu.memory_space<smem>>
    %c5_35 = arith.constant 5 : index
    %23 = memref.load %arg2[%c5_35] : memref<6xf32, #tpu.memory_space<smem>>
    %c0_36 = arith.constant 0 : index
    %c0_37 = arith.constant 0 : index
    %24 = memref.load %arg3[%c0_36, %c0_37] : memref<6x3xf32, #tpu.memory_space<smem>>
    %c0_38 = arith.constant 0 : index
    %c1_39 = arith.constant 1 : index
    %25 = memref.load %arg3[%c0_38, %c1_39] : memref<6x3xf32, #tpu.memory_space<smem>>
    %c0_40 = arith.constant 0 : index
    %c2_41 = arith.constant 2 : index
    %26 = memref.load %arg3[%c0_40, %c2_41] : memref<6x3xf32, #tpu.memory_space<smem>>
    %c1_42 = arith.constant 1 : index
    %c0_43 = arith.constant 0 : index
    %27 = memref.load %arg3[%c1_42, %c0_43] : memref<6x3xf32, #tpu.memory_space<smem>>
    %c1_44 = arith.constant 1 : index
    %c1_45 = arith.constant 1 : index
    %28 = memref.load %arg3[%c1_44, %c1_45] : memref<6x3xf32, #tpu.memory_space<smem>>
    %c1_46 = arith.constant 1 : index
    %c2_47 = arith.constant 2 : index
    %29 = memref.load %arg3[%c1_46, %c2_47] : memref<6x3xf32, #tpu.memory_space<smem>>
    %c2_48 = arith.constant 2 : index
    %c0_49 = arith.constant 0 : index
    %30 = memref.load %arg3[%c2_48, %c0_49] : memref<6x3xf32, #tpu.memory_space<smem>>
    %c2_50 = arith.constant 2 : index
    %c1_51 = arith.constant 1 : index
    %31 = memref.load %arg3[%c2_50, %c1_51] : memref<6x3xf32, #tpu.memory_space<smem>>
    %c2_52 = arith.constant 2 : index
    %c2_53 = arith.constant 2 : index
    %32 = memref.load %arg3[%c2_52, %c2_53] : memref<6x3xf32, #tpu.memory_space<smem>>
    %c3_54 = arith.constant 3 : index
    %c0_55 = arith.constant 0 : index
    %33 = memref.load %arg3[%c3_54, %c0_55] : memref<6x3xf32, #tpu.memory_space<smem>>
    %c3_56 = arith.constant 3 : index
    %c1_57 = arith.constant 1 : index
    %34 = memref.load %arg3[%c3_56, %c1_57] : memref<6x3xf32, #tpu.memory_space<smem>>
    %c3_58 = arith.constant 3 : index
    %c2_59 = arith.constant 2 : index
    %35 = memref.load %arg3[%c3_58, %c2_59] : memref<6x3xf32, #tpu.memory_space<smem>>
    %c4_60 = arith.constant 4 : index
    %c0_61 = arith.constant 0 : index
    %36 = memref.load %arg3[%c4_60, %c0_61] : memref<6x3xf32, #tpu.memory_space<smem>>
    %c4_62 = arith.constant 4 : index
    %c1_63 = arith.constant 1 : index
    %37 = memref.load %arg3[%c4_62, %c1_63] : memref<6x3xf32, #tpu.memory_space<smem>>
    %c4_64 = arith.constant 4 : index
    %c2_65 = arith.constant 2 : index
    %38 = memref.load %arg3[%c4_64, %c2_65] : memref<6x3xf32, #tpu.memory_space<smem>>
    %c5_66 = arith.constant 5 : index
    %c0_67 = arith.constant 0 : index
    %39 = memref.load %arg3[%c5_66, %c0_67] : memref<6x3xf32, #tpu.memory_space<smem>>
    %c5_68 = arith.constant 5 : index
    %c1_69 = arith.constant 1 : index
    %40 = memref.load %arg3[%c5_68, %c1_69] : memref<6x3xf32, #tpu.memory_space<smem>>
    %c5_70 = arith.constant 5 : index
    %c2_71 = arith.constant 2 : index
    %41 = memref.load %arg3[%c5_70, %c2_71] : memref<6x3xf32, #tpu.memory_space<smem>>
    %c0_72 = arith.constant 0 : index
    %42 = memref.load %arg4[%c0_72] : memref<3xf32, #tpu.memory_space<smem>>
    %c1_73 = arith.constant 1 : index
    %43 = memref.load %arg4[%c1_73] : memref<3xf32, #tpu.memory_space<smem>>
    %c2_74 = arith.constant 2 : index
    %44 = memref.load %arg4[%c2_74] : memref<3xf32, #tpu.memory_space<smem>>
    %c0_75 = arith.constant 0 : index
    %c0_76 = arith.constant 0 : index
    %c0_77 = arith.constant 0 : index
    %45 = vector.load %arg5[%c0_75, %c0_76, %c0_77] : memref<3x1x128xf32, #tpu.memory_space<vmem>>, vector<1x1x128xf32>
    %46 = vector.shape_cast %45 : vector<1x1x128xf32> to vector<1x128xf32>
    %c1_78 = arith.constant 1 : index
    %c0_79 = arith.constant 0 : index
    %c0_80 = arith.constant 0 : index
    %47 = vector.load %arg5[%c1_78, %c0_79, %c0_80] : memref<3x1x128xf32, #tpu.memory_space<vmem>>, vector<1x1x128xf32>
    %48 = vector.shape_cast %47 : vector<1x1x128xf32> to vector<1x128xf32>
    %c2_81 = arith.constant 2 : index
    %c0_82 = arith.constant 0 : index
    %c0_83 = arith.constant 0 : index
    %49 = vector.load %arg5[%c2_81, %c0_82, %c0_83] : memref<3x1x128xf32, #tpu.memory_space<vmem>>, vector<1x1x128xf32>
    %50 = vector.shape_cast %49 : vector<1x1x128xf32> to vector<1x128xf32>
    %51 = vector.broadcast %0 : f32 to vector<1x128xf32>
    %52 = arith.mulf %46, %51 : vector<1x128xf32>
    %53 = vector.broadcast %6 : f32 to vector<1x128xf32>
    %54 = arith.mulf %48, %53 : vector<1x128xf32>
    %55 = arith.addf %52, %54 : vector<1x128xf32>
    %56 = vector.broadcast %12 : f32 to vector<1x128xf32>
    %57 = arith.mulf %50, %56 : vector<1x128xf32>
    %58 = arith.addf %55, %57 : vector<1x128xf32>
    %59 = vector.broadcast %18 : f32 to vector<1x128xf32>
    %60 = arith.addf %58, %59 : vector<1x128xf32>
    %cst = arith.constant 0.000000e+00 : f32
    %61 = vector.broadcast %cst : f32 to vector<1x128xf32>
    %62 = arith.maximumf %60, %61 : vector<1x128xf32>
    %63 = vector.broadcast %24 : f32 to vector<1x128xf32>
    %64 = arith.mulf %62, %63 : vector<1x128xf32>
    %65 = vector.broadcast %25 : f32 to vector<1x128xf32>
    %66 = arith.mulf %62, %65 : vector<1x128xf32>
    %67 = vector.broadcast %26 : f32 to vector<1x128xf32>
    %68 = arith.mulf %62, %67 : vector<1x128xf32>
    %69 = vector.broadcast %1 : f32 to vector<1x128xf32>
    %70 = arith.mulf %46, %69 : vector<1x128xf32>
    %71 = vector.broadcast %7 : f32 to vector<1x128xf32>
    %72 = arith.mulf %48, %71 : vector<1x128xf32>
    %73 = arith.addf %70, %72 : vector<1x128xf32>
    %74 = vector.broadcast %13 : f32 to vector<1x128xf32>
    %75 = arith.mulf %50, %74 : vector<1x128xf32>
    %76 = arith.addf %73, %75 : vector<1x128xf32>
    %77 = vector.broadcast %19 : f32 to vector<1x128xf32>
    %78 = arith.addf %76, %77 : vector<1x128xf32>
    %cst_84 = arith.constant 0.000000e+00 : f32
    %79 = vector.broadcast %cst_84 : f32 to vector<1x128xf32>
    %80 = arith.maximumf %78, %79 : vector<1x128xf32>
    %81 = vector.broadcast %27 : f32 to vector<1x128xf32>
    %82 = arith.mulf %80, %81 : vector<1x128xf32>
    %83 = arith.addf %64, %82 : vector<1x128xf32>
    %84 = vector.broadcast %28 : f32 to vector<1x128xf32>
    %85 = arith.mulf %80, %84 : vector<1x128xf32>
    %86 = arith.addf %66, %85 : vector<1x128xf32>
    %87 = vector.broadcast %29 : f32 to vector<1x128xf32>
    %88 = arith.mulf %80, %87 : vector<1x128xf32>
    %89 = arith.addf %68, %88 : vector<1x128xf32>
    %90 = vector.broadcast %2 : f32 to vector<1x128xf32>
    %91 = arith.mulf %46, %90 : vector<1x128xf32>
    %92 = vector.broadcast %8 : f32 to vector<1x128xf32>
    %93 = arith.mulf %48, %92 : vector<1x128xf32>
    %94 = arith.addf %91, %93 : vector<1x128xf32>
    %95 = vector.broadcast %14 : f32 to vector<1x128xf32>
    %96 = arith.mulf %50, %95 : vector<1x128xf32>
    %97 = arith.addf %94, %96 : vector<1x128xf32>
    %98 = vector.broadcast %20 : f32 to vector<1x128xf32>
    %99 = arith.addf %97, %98 : vector<1x128xf32>
    %cst_85 = arith.constant 0.000000e+00 : f32
    %100 = vector.broadcast %cst_85 : f32 to vector<1x128xf32>
    %101 = arith.maximumf %99, %100 : vector<1x128xf32>
    %102 = vector.broadcast %30 : f32 to vector<1x128xf32>
    %103 = arith.mulf %101, %102 : vector<1x128xf32>
    %104 = arith.addf %83, %103 : vector<1x128xf32>
    %105 = vector.broadcast %31 : f32 to vector<1x128xf32>
    %106 = arith.mulf %101, %105 : vector<1x128xf32>
    %107 = arith.addf %86, %106 : vector<1x128xf32>
    %108 = vector.broadcast %32 : f32 to vector<1x128xf32>
    %109 = arith.mulf %101, %108 : vector<1x128xf32>
    %110 = arith.addf %89, %109 : vector<1x128xf32>
    %111 = vector.broadcast %3 : f32 to vector<1x128xf32>
    %112 = arith.mulf %46, %111 : vector<1x128xf32>
    %113 = vector.broadcast %9 : f32 to vector<1x128xf32>
    %114 = arith.mulf %48, %113 : vector<1x128xf32>
    %115 = arith.addf %112, %114 : vector<1x128xf32>
    %116 = vector.broadcast %15 : f32 to vector<1x128xf32>
    %117 = arith.mulf %50, %116 : vector<1x128xf32>
    %118 = arith.addf %115, %117 : vector<1x128xf32>
    %119 = vector.broadcast %21 : f32 to vector<1x128xf32>
    %120 = arith.addf %118, %119 : vector<1x128xf32>
    %cst_86 = arith.constant 0.000000e+00 : f32
    %121 = vector.broadcast %cst_86 : f32 to vector<1x128xf32>
    %122 = arith.maximumf %120, %121 : vector<1x128xf32>
    %123 = vector.broadcast %33 : f32 to vector<1x128xf32>
    %124 = arith.mulf %122, %123 : vector<1x128xf32>
    %125 = arith.addf %104, %124 : vector<1x128xf32>
    %126 = vector.broadcast %34 : f32 to vector<1x128xf32>
    %127 = arith.mulf %122, %126 : vector<1x128xf32>
    %128 = arith.addf %107, %127 : vector<1x128xf32>
    %129 = vector.broadcast %35 : f32 to vector<1x128xf32>
    %130 = arith.mulf %122, %129 : vector<1x128xf32>
    %131 = arith.addf %110, %130 : vector<1x128xf32>
    %132 = vector.broadcast %4 : f32 to vector<1x128xf32>
    %133 = arith.mulf %46, %132 : vector<1x128xf32>
    %134 = vector.broadcast %10 : f32 to vector<1x128xf32>
    %135 = arith.mulf %48, %134 : vector<1x128xf32>
    %136 = arith.addf %133, %135 : vector<1x128xf32>
    %137 = vector.broadcast %16 : f32 to vector<1x128xf32>
    %138 = arith.mulf %50, %137 : vector<1x128xf32>
    %139 = arith.addf %136, %138 : vector<1x128xf32>
    %140 = vector.broadcast %22 : f32 to vector<1x128xf32>
    %141 = arith.addf %139, %140 : vector<1x128xf32>
    %cst_87 = arith.constant 0.000000e+00 : f32
    %142 = vector.broadcast %cst_87 : f32 to vector<1x128xf32>
    %143 = arith.maximumf %141, %142 : vector<1x128xf32>
    %144 = vector.broadcast %36 : f32 to vector<1x128xf32>
    %145 = arith.mulf %143, %144 : vector<1x128xf32>
    %146 = arith.addf %125, %145 : vector<1x128xf32>
    %147 = vector.broadcast %37 : f32 to vector<1x128xf32>
    %148 = arith.mulf %143, %147 : vector<1x128xf32>
    %149 = arith.addf %128, %148 : vector<1x128xf32>
    %150 = vector.broadcast %38 : f32 to vector<1x128xf32>
    %151 = arith.mulf %143, %150 : vector<1x128xf32>
    %152 = arith.addf %131, %151 : vector<1x128xf32>
    %153 = vector.broadcast %5 : f32 to vector<1x128xf32>
    %154 = arith.mulf %46, %153 : vector<1x128xf32>
    %155 = vector.broadcast %11 : f32 to vector<1x128xf32>
    %156 = arith.mulf %48, %155 : vector<1x128xf32>
    %157 = arith.addf %154, %156 : vector<1x128xf32>
    %158 = vector.broadcast %17 : f32 to vector<1x128xf32>
    %159 = arith.mulf %50, %158 : vector<1x128xf32>
    %160 = arith.addf %157, %159 : vector<1x128xf32>
    %161 = vector.broadcast %23 : f32 to vector<1x128xf32>
    %162 = arith.addf %160, %161 : vector<1x128xf32>
    %cst_88 = arith.constant 0.000000e+00 : f32
    %163 = vector.broadcast %cst_88 : f32 to vector<1x128xf32>
    %164 = arith.maximumf %162, %163 : vector<1x128xf32>
    %165 = vector.broadcast %39 : f32 to vector<1x128xf32>
    %166 = arith.mulf %164, %165 : vector<1x128xf32>
    %167 = arith.addf %146, %166 : vector<1x128xf32>
    %168 = vector.broadcast %40 : f32 to vector<1x128xf32>
    %169 = arith.mulf %164, %168 : vector<1x128xf32>
    %170 = arith.addf %149, %169 : vector<1x128xf32>
    %171 = vector.broadcast %41 : f32 to vector<1x128xf32>
    %172 = arith.mulf %164, %171 : vector<1x128xf32>
    %173 = arith.addf %152, %172 : vector<1x128xf32>
    %174 = vector.broadcast %42 : f32 to vector<1x128xf32>
    %175 = arith.addf %167, %174 : vector<1x128xf32>
    %c0_89 = arith.constant 0 : index
    %c0_90 = arith.constant 0 : index
    %c0_91 = arith.constant 0 : index
    %176 = vector.load %arg6[%c0_89, %c0_90, %c0_91] : memref<3x1x128xf32, #tpu.memory_space<vmem>>, vector<1x1x128xf32>
    %177 = vector.shape_cast %176 : vector<1x1x128xf32> to vector<1x128xf32>
    %178 = vector.shape_cast %175 : vector<1x128xf32> to vector<1x1x128xf32>
    tpu.vector_store %arg6[%c0_89, %c0_90, %c0_91], %178 {strides = array<i32>} : memref<3x1x128xf32, #tpu.memory_space<vmem>>, vector<1x1x128xf32>,
    %179 = vector.broadcast %43 : f32 to vector<1x128xf32>
    %180 = arith.addf %170, %179 : vector<1x128xf32>
    %c1_92 = arith.constant 1 : index
    %c0_93 = arith.constant 0 : index
    %c0_94 = arith.constant 0 : index
    %181 = vector.load %arg6[%c1_92, %c0_93, %c0_94] : memref<3x1x128xf32, #tpu.memory_space<vmem>>, vector<1x1x128xf32>
    %182 = vector.shape_cast %181 : vector<1x1x128xf32> to vector<1x128xf32>
    %183 = vector.shape_cast %180 : vector<1x128xf32> to vector<1x1x128xf32>
    tpu.vector_store %arg6[%c1_92, %c0_93, %c0_94], %183 {strides = array<i32>} : memref<3x1x128xf32, #tpu.memory_space<vmem>>, vector<1x1x128xf32>,
    %184 = vector.broadcast %44 : f32 to vector<1x128xf32>
    %185 = arith.addf %173, %184 : vector<1x128xf32>
    %c2_95 = arith.constant 2 : index
    %c0_96 = arith.constant 0 : index
    %c0_97 = arith.constant 0 : index
    %186 = vector.load %arg6[%c2_95, %c0_96, %c0_97] : memref<3x1x128xf32, #tpu.memory_space<vmem>>, vector<1x1x128xf32>
    %187 = vector.shape_cast %186 : vector<1x1x128xf32> to vector<1x128xf32>
    %188 = vector.shape_cast %185 : vector<1x128xf32> to vector<1x1x128xf32>
    tpu.vector_store %arg6[%c2_95, %c0_96, %c0_97], %188 {strides = array<i32>} : memref<3x1x128xf32, #tpu.memory_space<vmem>>, vector<1x1x128xf32>,
    return
  }
  func.func @transform_0(%arg0: i32) -> (i32, i32) {
    %c0_i32 = arith.constant 0 : i32
    %c0_i32_0 = arith.constant 0 : i32
    %c0_i32_1 = arith.constant 0 : i32
    return %c0_i32, %c0_i32_0 : i32, i32
  }
  func.func @transform_1(%arg0: i32) -> i32 {
    %c0_i32 = arith.constant 0 : i32
    %c0_i32_0 = arith.constant 0 : i32
    return %c0_i32 : i32
  }
  func.func @transform_2(%arg0: i32) -> (i32, i32) {
    %c0_i32 = arith.constant 0 : i32
    %c0_i32_0 = arith.constant 0 : i32
    %c0_i32_1 = arith.constant 0 : i32
    return %c0_i32, %c0_i32_0 : i32, i32
  }
  func.func @transform_3(%arg0: i32) -> i32 {
    %c0_i32 = arith.constant 0 : i32
    %c0_i32_0 = arith.constant 0 : i32
    return %c0_i32 : i32
  }
  func.func @transform_4(%arg0: i32) -> (i32, i32, i32) {
    %c0_i32 = arith.constant 0 : i32
    %c0_i32_0 = arith.constant 0 : i32
    %c0_i32_1 = arith.constant 0 : i32
    return %c0_i32, %arg0, %c0_i32_0 : i32, i32, i32
  }
  func.func @transform_5(%arg0: i32) -> (i32, i32, i32) {
    %c0_i32 = arith.constant 0 : i32
    %c0_i32_0 = arith.constant 0 : i32
    %c0_i32_1 = arith.constant 0 : i32
    return %c0_i32, %arg0, %c0_i32_0 : i32, i32, i32
  }
}

</mosaic_0001>

<llo_original>
// kernel: tpu_custom_call.1
$region0: #{tpu_custom_call.1}
  #allocation0 [shape = 'u32[]', space=smem, size = 0x4, offset = 0x4, fixed_abs, tag = 'smem constant byte address 0x4 - core index']
  #allocation1 [shape = 'u32[144,128]{1,0:T(1,128)}', space=vmem, size = 0x12000, scoped, tag = 'internal scratch']
  %s0 = inlined_call_operand.vmem [shape: f32[3,6], index: 0, kind: input, shape index: {}]
  %s1 = inlined_call_operand.vmem [shape: f32[6], index: 1, kind: input, shape index: {}]
  %s2 = inlined_call_operand.vmem [shape: f32[6,3], index: 2, kind: input, shape index: {}]
  %s3 = inlined_call_operand.vmem [shape: f32[3], index: 3, kind: input, shape index: {}]
  %s4 = inlined_call_operand.vmem [shape: f32[3,1,128], index: 4, kind: input, shape index: {}]
  %s5 = inlined_call_operand.hbm [shape: f32[3,1,128], index: 5, kind: output, shape index: {}]
  %s6 = sld [smem:[#allocation0]]
  $region46: #{tpu_custom_call.1} parent=0
    _
  %s8 = ssub.s32 1, %s6
  %s9 = scalar_select 0, %s8, %s6
  $region1: #{tpu_custom_call.1} parent=0
    #allocation2 [shape = 'u8[2048]{0}', space=smem, size = 0x800, scoped, tag = 'input window, operand 0, single buffered']
    #allocation3 [shape = 's32[1]{0}', space=sflag, size = 0x4, scoped, tag = 'scoped memory for tpu_custom_call.1']
    #allocation4 [shape = 's32[1]{0}', space=sflag, size = 0x4, scoped, tag = 'scoped memory for tpu_custom_call.1']
    #allocation5 [shape = 'u8[512]{0}', space=smem, size = 0x200, scoped, tag = 'input window, operand 1, single buffered']
    #allocation6 [shape = 's32[1]{0}', space=sflag, size = 0x4, scoped, tag = 'scoped memory for tpu_custom_call.1']
    #allocation7 [shape = 'u8[4096]{0}', space=smem, size = 0x1000, scoped, tag = 'input window, operand 2, single buffered']
    #allocation8 [shape = 'u8[512]{0}', space=smem, size = 0x200, scoped, tag = 'input window, operand 3, single buffered']
    #allocation9 [shape = 's32[1]{0}', space=sflag, size = 0x4, scoped, tag = 'scoped memory for tpu_custom_call.1']
    #allocation10 [shape = 'u8[1536]{0}', space=vmem, size = 0x800, scoped, tag = 'output window, operand 0, single buffered']
    %10 = vsyncpa [#allocation4], 0
    %11 = vsyncpa [#allocation6], 0
    %12 = vsyncpa [#allocation9], 0
    %13 = vsyncpa [#allocation3], 0
    // Predicated region
    $region2: #{tpu_custom_call.1} parent=1 // pred_check
      _
    $region3: #{tpu_custom_call.1} parent=1 // pred_check_branch
      %15 = sbr.rel (0) target = $region5
    $region4: #{tpu_custom_call.1} parent=1 // pred_region
      %s17 = ssub.s32 64, 64
      %18 = vsyncadd [#allocation4], %s17
      %s20 = sshll.u32 %s0, 4
      %s21 = int_to_ptr.vmem [resolvable:$true] %s20
      %23 = dma.vmem_to_smem %s21, 64, [#allocation2], [#allocation4]
    $region5: #{tpu_custom_call.1} parent=1 // pred_fallthru
      _
    // Predicated region
    $region6: #{tpu_custom_call.1} parent=1 // pred_check
      _
    $region7: #{tpu_custom_call.1} parent=1 // pred_check_branch
      %25 = sbr.rel (0) target = $region9
    $region8: #{tpu_custom_call.1} parent=1 // pred_region
      %s27 = ssub.s32 16, 16
      %28 = vsyncadd [#allocation6], %s27
      %s30 = sshll.u32 %s1, 4
      %s31 = int_to_ptr.vmem [resolvable:$true] %s30
      %33 = dma.vmem_to_smem %s31, 16, [#allocation5], [#allocation6]
    $region9: #{tpu_custom_call.1} parent=1 // pred_fallthru
      _
    // Predicated region
    $region10: #{tpu_custom_call.1} parent=1 // pred_check
      _
    $region11: #{tpu_custom_call.1} parent=1 // pred_check_branch
      %35 = sbr.rel (0) target = $region13
    $region12: #{tpu_custom_call.1} parent=1 // pred_region
      %s37 = ssub.s32 128, 128
      %38 = vsyncadd [#allocation6], %s37
      %s40 = sshll.u32 %s2, 4
      %s41 = int_to_ptr.vmem [resolvable:$true] %s40
      %43 = dma.vmem_to_smem %s41, 128, [#allocation7], [#allocation6]
    $region13: #{tpu_custom_call.1} parent=1 // pred_fallthru
      _
    // Predicated region
    $region14: #{tpu_custom_call.1} parent=1 // pred_check
      _
    $region15: #{tpu_custom_call.1} parent=1 // pred_check_branch
      %45 = sbr.rel (0) target = $region17
    $region16: #{tpu_custom_call.1} parent=1 // pred_region
      %s47 = ssub.s32 16, 16
      %48 = vsyncadd [#allocation9], %s47
      %s50 = sshll.u32 %s3, 4
      %s51 = int_to_ptr.vmem [resolvable:$true] %s50
      %53 = dma.vmem_to_smem %s51, 16, [#allocation8], [#allocation9]
    $region17: #{tpu_custom_call.1} parent=1 // pred_fallthru
      _
    // Predicated region
    $region18: #{tpu_custom_call.1} parent=1 // pred_check
      _
    $region19: #{tpu_custom_call.1} parent=1 // pred_check_branch
      %55 = sbr.rel (0) target = $region21
    $region20: #{tpu_custom_call.1} parent=1 // pred_region
      _
    $region21: #{tpu_custom_call.1} parent=1 // pred_fallthru
      _
    // Predicated region
    $region22: #{tpu_custom_call.1} parent=1 // pred_check
      _
    $region23: #{tpu_custom_call.1} parent=1 // pred_check_branch
      %57 = sbr.rel (0) target = $region25
    $region24: #{tpu_custom_call.1} parent=1 // pred_region
      %58 = dma.done [#allocation4], 64
    $region25: #{tpu_custom_call.1} parent=1 // pred_fallthru
      _
    // Predicated region
    $region26: #{tpu_custom_call.1} parent=1 // pred_check
      _
    $region27: #{tpu_custom_call.1} parent=1 // pred_check_branch
      %60 = sbr.rel (0) target = $region29
    $region28: #{tpu_custom_call.1} parent=1 // pred_region
      %61 = dma.done [#allocation6], 16
    $region29: #{tpu_custom_call.1} parent=1 // pred_fallthru
      _
    // Predicated region
    $region30: #{tpu_custom_call.1} parent=1 // pred_check
      _
    $region31: #{tpu_custom_call.1} parent=1 // pred_check_branch
      %63 = sbr.rel (0) target = $region33
    $region32: #{tpu_custom_call.1} parent=1 // pred_region
      %64 = dma.done [#allocation6], 128
    $region33: #{tpu_custom_call.1} parent=1 // pred_fallthru
      _
    // Predicated region
    $region34: #{tpu_custom_call.1} parent=1 // pred_check
      _
    $region35: #{tpu_custom_call.1} parent=1 // pred_check_branch
      %66 = sbr.rel (0) target = $region37
    $region36: #{tpu_custom_call.1} parent=1 // pred_region
      %67 = dma.done [#allocation9], 16
    $region37: #{tpu_custom_call.1} parent=1 // pred_fallthru
      _
    %68 = sfence
    %s69 = sld [smem:[#allocation2]]
    %s70 = sld [smem:[#allocation2 + $0x1]]
    %s71 = sld [smem:[#allocation2 + $0x2]]
    %s72 = sld [smem:[#allocation2 + $0x3]]
    %s73 = sld [smem:[#allocation2 + $0x4]]
    %s74 = sld [smem:[#allocation2 + $0x5]]
    %s75 = sld [smem:[#allocation2 + $0x80]]
    %s76 = sld [smem:[#allocation2 + $0x81]]
    %s77 = sld [smem:[#allocation2 + $0x82]]
    %s78 = sld [smem:[#allocation2 + $0x83]]
    %s79 = sld [smem:[#allocation2 + $0x84]]
    %s80 = sld [smem:[#allocation2 + $0x85]]
    %s81 = sld [smem:[#allocation2 + $0x100]]
    %s82 = sld [smem:[#allocation2 + $0x101]]
    %s83 = sld [smem:[#allocation2 + $0x102]]
    %s84 = sld [smem:[#allocation2 + $0x103]]
    %s85 = sld [smem:[#allocation2 + $0x104]]
    %s86 = sld [smem:[#allocation2 + $0x105]]
    %s87 = sld [smem:[#allocation5]]
    %s88 = sld [smem:[#allocation5 + $0x1]]
    %s89 = sld [smem:[#allocation5 + $0x2]]
    %s90 = sld [smem:[#allocation5 + $0x3]]
    %s91 = sld [smem:[#allocation5 + $0x4]]
    %s92 = sld [smem:[#allocation5 + $0x5]]
    %s93 = sld [smem:[#allocation7]]
    %s94 = sld [smem:[#allocation7 + $0x1]]
    %s95 = sld [smem:[#allocation7 + $0x2]]
    %s96 = sld [smem:[#allocation7 + $0x80]]
    %s97 = sld [smem:[#allocation7 + $0x81]]
    %s98 = sld [smem:[#allocation7 + $0x82]]
    %s99 = sld [smem:[#allocation7 + $0x100]]
    %s100 = sld [smem:[#allocation7 + $0x101]]
    %s101 = sld [smem:[#allocation7 + $0x102]]
    %s102 = sld [smem:[#allocation7 + $0x180]]
    %s103 = sld [smem:[#allocation7 + $0x181]]
    %s104 = sld [smem:[#allocation7 + $0x182]]
    %s105 = sld [smem:[#allocation7 + $0x200]]
    %s106 = sld [smem:[#allocation7 + $0x201]]
    %s107 = sld [smem:[#allocation7 + $0x202]]
    %s108 = sld [smem:[#allocation7 + $0x280]]
    %s109 = sld [smem:[#allocation7 + $0x281]]
    %s110 = sld [smem:[#allocation7 + $0x282]]
    %s111 = sld [smem:[#allocation8]]
    %s112 = sld [smem:[#allocation8 + $0x1]]
    %s113 = sld [smem:[#allocation8 + $0x2]]
    %v114 = vld [vmem:[%s4] sm:$0x1]
    %s115 = scalar_lea.vmem %s4, 1
    %v116 = vld [vmem:[%s115] sm:$0x1]
    %s117 = scalar_lea.vmem %s4, 2
    %v118 = vld [vmem:[%s117] sm:$0x1]
    %v119 = vstv %s69
    %v120 = vmul.f32 %v114, %v119
    %v121 = vstv %s75
    %v122 = vmul.f32 %v116, %v121
    %v123 = vadd.f32 %v120, %v122
    %v124 = vstv %s81
    %v125 = vmul.f32 %v118, %v124
    %v126 = vadd.f32 %v123, %v125
    %v127 = vstv %s87
    %v128 = vadd.f32 %v126, %v127
    %v129 = vmax.f32 %v128, 0.0
    %v130 = vstv %s93
    %v131 = vmul.f32 %v129, %v130
    %v132 = vstv %s94
    %v133 = vmul.f32 %v129, %v132
    %v134 = vstv %s95
    %v135 = vmul.f32 %v129, %v134
    %v136 = vstv %s70
    %v137 = vmul.f32 %v114, %v136
    %v138 = vstv %s76
    %v139 = vmul.f32 %v116, %v138
    %v140 = vadd.f32 %v137, %v139
    %v141 = vstv %s82
    %v142 = vmul.f32 %v118, %v141
    %v143 = vadd.f32 %v140, %v142
    %v144 = vstv %s88
    %v145 = vadd.f32 %v143, %v144
    %v146 = vmax.f32 %v145, 0.0
    %v147 = vstv %s96
    %v148 = vmul.f32 %v146, %v147
    %v149 = vadd.f32 %v131, %v148
    %v150 = vstv %s97
    %v151 = vmul.f32 %v146, %v150
    %v152 = vadd.f32 %v133, %v151
    %v153 = vstv %s98
    %v154 = vmul.f32 %v146, %v153
    %v155 = vadd.f32 %v135, %v154
    %v156 = vstv %s71
    %v157 = vmul.f32 %v114, %v156
    %v158 = vstv %s77
    %v159 = vmul.f32 %v116, %v158
    %v160 = vadd.f32 %v157, %v159
    %v161 = vstv %s83
    %v162 = vmul.f32 %v118, %v161
    %v163 = vadd.f32 %v160, %v162
    %v164 = vstv %s89
    %v165 = vadd.f32 %v163, %v164
    %v166 = vmax.f32 %v165, 0.0
    %v167 = vstv %s99
    %v168 = vmul.f32 %v166, %v167
    %v169 = vadd.f32 %v149, %v168
    %v170 = vstv %s100
    %v171 = vmul.f32 %v166, %v170
    %v172 = vadd.f32 %v152, %v171
    %v173 = vstv %s101
    %v174 = vmul.f32 %v166, %v173
    %v175 = vadd.f32 %v155, %v174
    %v176 = vstv %s72
    %v177 = vmul.f32 %v114, %v176
    %v178 = vstv %s78
    %v179 = vmul.f32 %v116, %v178
    %v180 = vadd.f32 %v177, %v179
    %v181 = vstv %s84
    %v182 = vmul.f32 %v118, %v181
    %v183 = vadd.f32 %v180, %v182
    %v184 = vstv %s90
    %v185 = vadd.f32 %v183, %v184
    %v186 = vmax.f32 %v185, 0.0
    %v187 = vstv %s102
    %v188 = vmul.f32 %v186, %v187
    %v189 = vadd.f32 %v169, %v188
    %v190 = vstv %s103
    %v191 = vmul.f32 %v186, %v190
    %v192 = vadd.f32 %v172, %v191
    %v193 = vstv %s104
    %v194 = vmul.f32 %v186, %v193
    %v195 = vadd.f32 %v175, %v194
    %v196 = vstv %s73
    %v197 = vmul.f32 %v114, %v196
    %v198 = vstv %s79
    %v199 = vmul.f32 %v116, %v198
    %v200 = vadd.f32 %v197, %v199
    %v201 = vstv %s85
    %v202 = vmul.f32 %v118, %v201
    %v203 = vadd.f32 %v200, %v202
    %v204 = vstv %s91
    %v205 = vadd.f32 %v203, %v204
    %v206 = vmax.f32 %v205, 0.0
    %v207 = vstv %s105
    %v208 = vmul.f32 %v206, %v207
    %v209 = vadd.f32 %v189, %v208
    %v210 = vstv %s106
    %v211 = vmul.f32 %v206, %v210
    %v212 = vadd.f32 %v192, %v211
    %v213 = vstv %s107
    %v214 = vmul.f32 %v206, %v213
    %v215 = vadd.f32 %v195, %v214
    %v216 = vstv %s74
    %v217 = vmul.f32 %v114, %v216
    %v218 = vstv %s80
    %v219 = vmul.f32 %v116, %v218
    %v220 = vadd.f32 %v217, %v219
    %v221 = vstv %s86
    %v222 = vmul.f32 %v118, %v221
    %v223 = vadd.f32 %v220, %v222
    %v224 = vstv %s92
    %v225 = vadd.f32 %v223, %v224
    %v226 = vmax.f32 %v225, 0.0
    %v227 = vstv %s108
    %v228 = vmul.f32 %v226, %v227
    %v229 = vadd.f32 %v209, %v228
    %v230 = vstv %s109
    %v231 = vmul.f32 %v226, %v230
    %v232 = vadd.f32 %v212, %v231
    %v233 = vstv %s110
    %v234 = vmul.f32 %v226, %v233
    %v235 = vadd.f32 %v215, %v234
    %v236 = vstv %s111
    %v237 = vadd.f32 %v229, %v236
    %238 = vst [vmem:[#allocation10] sm:$0x1] %v237
    %v239 = vstv %s112
    %v240 = vadd.f32 %v232, %v239
    %s241 = scalar_lea.vmem [#allocation10], 1
    %242 = vst [vmem:[%s241] sm:$0x1] %v240
    %v243 = vstv %s113
    %v244 = vadd.f32 %v235, %v243
    %s245 = scalar_lea.vmem [#allocation10], 2
    %246 = vst [vmem:[%s245] sm:$0x1] %v244
    // Predicated region
    $region38: #{tpu_custom_call.1} parent=1 // pred_check
      _
    $region39: #{tpu_custom_call.1} parent=1 // pred_check_branch
      %248 = sbr.rel (0) target = $region41
    $region40: #{tpu_custom_call.1} parent=1 // pred_region
      %s250 = ssub.s32 48, 48
      %251 = vsyncadd [#allocation3], %s250
      %s252 = sshll.u32 [#allocation10], 4
      %s253 = int_to_ptr.vmem [resolvable:$true] %s252
      %258 = dma.vmem_to_hbm [thread:$0]  %s253, 48, %s5, [#allocation3], 16, 16, 1
    $region41: #{tpu_custom_call.1} parent=1 // pred_fallthru
      _
    // Predicated region
    $region42: #{tpu_custom_call.1} parent=1 // pred_check
      _
    $region43: #{tpu_custom_call.1} parent=1 // pred_check_branch
      %260 = sbr.rel (0) target = $region45
    $region44: #{tpu_custom_call.1} parent=1 // pred_region
      %261 = dma.done [#allocation3], 48
    $region45: #{tpu_custom_call.1} parent=1 // pred_fallthru
      _
    %262 = vsyncpa [#allocation3], 1
    %263 = vsyncpa [#allocation4], 1
    %264 = vsyncpa [#allocation6], 1
    %265 = vsyncpa [#allocation9], 1

</llo_original>
